<compile_context>
chip_gen: v7x
topology: tpu7x:2x2x1
jax: 0.10.0
libtpu: 0.0.40
codegen_flags: <defaults>
</compile_context>

<pallas_src>
import jax
import jax.numpy as jnp
from jax.experimental import pallas as pl
from jax.experimental.pallas import tpu as pltpu

# Model hyper-parameters from the PyTorch spec.
D = 2         # state features
M = 1         # action features
HIDDEN = 10   # hidden neurons
K = 1.0       # output scale

# Packed-parameter layout: one small SMEM-resident f32 vector.
IDX_W1 = 0                      # w1[j, i] at IDX_W1 + j*D + i       (HIDDEN*D)
IDX_B1 = IDX_W1 + HIDDEN * D    # b1[j]                              (HIDDEN)
IDX_W2H = IDX_B1 + HIDDEN       # w2[0, j]           (hidden branch) (HIDDEN)
IDX_W2A = IDX_W2H + HIDDEN      # w2[0, HIDDEN + i]  (action branch) (M)
IDX_B2 = IDX_W2A + M            # b2                                 (1)
NPARAMS = IDX_B2 + 1

LANE = 128
MAX_TILE_B = 4096               # tile bytes ~= 16*B per buffer; tiny on every gen


def _round_up(x, m):
    return (x + m - 1) // m * m


def network2_kernel(p_ref, x_ref, o_ref):
    """p_ref: f32[NPARAMS] in SMEM (resident). x_ref: (D+M, TILE_B). o_ref: (1, TILE_B)."""
    # Static slices of the fused input stream; keep everything 2-D (1, TILE_B).
    s_rows = [x_ref[i:i + 1, :] for i in range(D)]
    a_rows = [x_ref[D + i:D + i + 1, :] for i in range(M)]

    # Action branch + output bias.
    out = p_ref[IDX_W2A] * a_rows[0] + p_ref[IDX_B2]
    for i in range(1, M):
        out = out + p_ref[IDX_W2A + i] * a_rows[i]

    # Hidden layer fused with the output contraction: unrolled VPU broadcast-FMAs.
    for j in range(HIDDEN):
        h_j = p_ref[IDX_W1 + j * D] * s_rows[0]
        for i in range(1, D):
            h_j = h_j + p_ref[IDX_W1 + j * D + i] * s_rows[i]
        h_j = h_j + p_ref[IDX_B1 + j]
        out = out + p_ref[IDX_W2H + j] * h_j

    y = jnp.tanh(out)
    if K != 1.0:               # fold the scale away when it is a no-op
        y = K * y
    o_ref[...] = y.astype(o_ref.dtype)


def network2_forward(s, a, w1, b1, w2, b2):
    """s: (B, D), a: (B, M).
    w1: (HIDDEN, D)   b1: (HIDDEN,)      -- PyTorch Linear layout
    w2: (1, HIDDEN+M) b2: (1,)
    Returns (B, 1).
    """
    B = s.shape[0]

    # Pack the 42 scalars into one SMEM vector (order matches IDX_* above).
    w2_flat = w2.reshape(-1)
    params = jnp.concatenate([
        w1.reshape(-1),           # row-major: w1[j, i]
        b1.reshape(-1),
        w2_flat[:HIDDEN],         # hidden-branch output weights
        w2_flat[HIDDEN:],         # action-branch output weights
        b2.reshape(-1),
    ]).astype(jnp.float32)

    # Fuse s and a into one stream with batch on the lane dimension: (D+M, B).
    x = jnp.concatenate([s, a], axis=1).T.astype(jnp.float32)

    # Lane-dense batch tiling; pad B to a whole number of tiles.
    tile_b = min(_round_up(B, LANE), MAX_TILE_B)
    b_pad = _round_up(B, tile_b)
    if b_pad != B:
        x = jnp.pad(x, ((0, 0), (0, b_pad - B)))

    grid_spec = pltpu.PrefetchScalarGridSpec(
        num_scalar_prefetch=0,
        grid=(b_pad // tile_b,),
        in_specs=[
            # Packed weights: whole array, resident in SMEM across all steps.
            pl.BlockSpec(memory_space=pltpu.MemorySpace.SMEM),
            # Fused [s; a] stream, pipelined over batch tiles.
            pl.BlockSpec((D + M, tile_b), lambda i: (0, i)),
        ],
        out_specs=pl.BlockSpec((1, tile_b), lambda i: (0, i)),
    )

    out = pl.pallas_call(
        network2_kernel,
        out_shape=jax.ShapeDtypeStruct((1, b_pad), jnp.float32),
        grid_spec=grid_spec,
        compiler_params=pltpu.CompilerParams(
            dimension_semantics=("parallel",),   # batch axis -> megacore split on v7x
            vmem_limit_bytes=32 * 1024 * 1024,
        ),
    )(params, x)

    return out[:, :B].T   # back to PyTorch layout (B, 1)


def network2_reference(s, a, w1, b1, w2, b2):
    h = s @ w1.T + b1
    hidden = jnp.concatenate([h, a], axis=1)
    out = hidden @ w2.T + b2
    return K * jnp.tanh(out)


if __name__ == "__main__":
    key = jax.random.PRNGKey(0)
    k_s, k_w1, k_b1, k_w2, k_b2 = jax.random.split(key, 5)

    B = 8
    s = jax.random.normal(k_s, (B, D), dtype=jnp.float32)
    a = jnp.full((B, M), 0.5, dtype=jnp.float32)  # mirrors a = [[0.5]*m] per row

    # Deterministic parameter init (PyTorch-like uniform bounds).
    bound1 = 1.0 / (D ** 0.5)
    w1 = jax.random.uniform(k_w1, (HIDDEN, D), jnp.float32, -bound1, bound1)
    b1 = jax.random.uniform(k_b1, (HIDDEN,), jnp.float32, -bound1, bound1)
    bound2 = 1.0 / ((HIDDEN + M) ** 0.5)
    w2 = jax.random.uniform(k_w2, (1, HIDDEN + M), jnp.float32, -bound2, bound2)
    b2 = jax.random.uniform(k_b2, (1,), jnp.float32, -bound2, bound2)

    out = network2_forward(s, a, w1, b1, w2, b2)
    out = jax.block_until_ready(out)

    ref = network2_reference(s, a, w1, b1, w2, b2)
    assert out.shape == (B, 1), out.shape
    assert jnp.allclose(out, ref, atol=1e-5, rtol=1e-5), float(jnp.max(jnp.abs(out - ref)))
    print("KERNEL_OK")
</pallas_src>

<mosaic_0001>
module attributes {stable_mosaic.version = 11 : i64} {
  func.func @network2_kernel(%arg0: i32, %arg1: memref<42xf32, #tpu.memory_space<smem>>, %arg2: memref<3x128xf32, #tpu.memory_space<vmem>>, %arg3: memref<1x128xf32, #tpu.memory_space<vmem>>) attributes {dimension_semantics = [#tpu.dimension_semantics<parallel>], iteration_bounds = array<i64: 1>, scalar_prefetch = 0 : i64, scratch_operands = 0 : i64, tpu.core_type = #tpu.core_type<tc>, window_params = [{transform_indices = @transform_0, window_bounds = array<i64: 42>}, {transform_indices = @transform_1, window_bounds = array<i64: 3, 128>}, {transform_indices = @transform_2, window_bounds = array<i64: 1, 128>}]} {
    %c0 = arith.constant 0 : index
    %c0_0 = arith.constant 0 : index
    %0 = vector.load %arg2[%c0, %c0_0] : memref<3x128xf32, #tpu.memory_space<vmem>>, vector<1x128xf32>
    %c1 = arith.constant 1 : index
    %c0_1 = arith.constant 0 : index
    %1 = vector.load %arg2[%c1, %c0_1] : memref<3x128xf32, #tpu.memory_space<vmem>>, vector<1x128xf32>
    %c2 = arith.constant 2 : index
    %c0_2 = arith.constant 0 : index
    %2 = vector.load %arg2[%c2, %c0_2] : memref<3x128xf32, #tpu.memory_space<vmem>>, vector<1x128xf32>
    %c40 = arith.constant 40 : index
    %3 = memref.load %arg1[%c40] : memref<42xf32, #tpu.memory_space<smem>>
    %4 = vector.broadcast %3 : f32 to vector<1x128xf32>
    %5 = arith.mulf %4, %2 : vector<1x128xf32>
    %c41 = arith.constant 41 : index
    %6 = memref.load %arg1[%c41] : memref<42xf32, #tpu.memory_space<smem>>
    %7 = vector.broadcast %6 : f32 to vector<1x128xf32>
    %8 = arith.addf %5, %7 : vector<1x128xf32>
    %c0_3 = arith.constant 0 : index
    %9 = memref.load %arg1[%c0_3] : memref<42xf32, #tpu.memory_space<smem>>
    %10 = vector.broadcast %9 : f32 to vector<1x128xf32>
    %11 = arith.mulf %10, %0 : vector<1x128xf32>
    %c1_4 = arith.constant 1 : index
    %12 = memref.load %arg1[%c1_4] : memref<42xf32, #tpu.memory_space<smem>>
    %13 = vector.broadcast %12 : f32 to vector<1x128xf32>
    %14 = arith.mulf %13, %1 : vector<1x128xf32>
    %15 = arith.addf %11, %14 : vector<1x128xf32>
    %c20 = arith.constant 20 : index
    %16 = memref.load %arg1[%c20] : memref<42xf32, #tpu.memory_space<smem>>
    %17 = vector.broadcast %16 : f32 to vector<1x128xf32>
    %18 = arith.addf %15, %17 : vector<1x128xf32>
    %c30 = arith.constant 30 : index
    %19 = memref.load %arg1[%c30] : memref<42xf32, #tpu.memory_space<smem>>
    %20 = vector.broadcast %19 : f32 to vector<1x128xf32>
    %21 = arith.mulf %20, %18 : vector<1x128xf32>
    %22 = arith.addf %8, %21 : vector<1x128xf32>
    %c2_5 = arith.constant 2 : index
    %23 = memref.load %arg1[%c2_5] : memref<42xf32, #tpu.memory_space<smem>>
    %24 = vector.broadcast %23 : f32 to vector<1x128xf32>
    %25 = arith.mulf %24, %0 : vector<1x128xf32>
    %c3 = arith.constant 3 : index
    %26 = memref.load %arg1[%c3] : memref<42xf32, #tpu.memory_space<smem>>
    %27 = vector.broadcast %26 : f32 to vector<1x128xf32>
    %28 = arith.mulf %27, %1 : vector<1x128xf32>
    %29 = arith.addf %25, %28 : vector<1x128xf32>
    %c21 = arith.constant 21 : index
    %30 = memref.load %arg1[%c21] : memref<42xf32, #tpu.memory_space<smem>>
    %31 = vector.broadcast %30 : f32 to vector<1x128xf32>
    %32 = arith.addf %29, %31 : vector<1x128xf32>
    %c31 = arith.constant 31 : index
    %33 = memref.load %arg1[%c31] : memref<42xf32, #tpu.memory_space<smem>>
    %34 = vector.broadcast %33 : f32 to vector<1x128xf32>
    %35 = arith.mulf %34, %32 : vector<1x128xf32>
    %36 = arith.addf %22, %35 : vector<1x128xf32>
    %c4 = arith.constant 4 : index
    %37 = memref.load %arg1[%c4] : memref<42xf32, #tpu.memory_space<smem>>
    %38 = vector.broadcast %37 : f32 to vector<1x128xf32>
    %39 = arith.mulf %38, %0 : vector<1x128xf32>
    %c5 = arith.constant 5 : index
    %40 = memref.load %arg1[%c5] : memref<42xf32, #tpu.memory_space<smem>>
    %41 = vector.broadcast %40 : f32 to vector<1x128xf32>
    %42 = arith.mulf %41, %1 : vector<1x128xf32>
    %43 = arith.addf %39, %42 : vector<1x128xf32>
    %c22 = arith.constant 22 : index
    %44 = memref.load %arg1[%c22] : memref<42xf32, #tpu.memory_space<smem>>
    %45 = vector.broadcast %44 : f32 to vector<1x128xf32>
    %46 = arith.addf %43, %45 : vector<1x128xf32>
    %c32 = arith.constant 32 : index
    %47 = memref.load %arg1[%c32] : memref<42xf32, #tpu.memory_space<smem>>
    %48 = vector.broadcast %47 : f32 to vector<1x128xf32>
    %49 = arith.mulf %48, %46 : vector<1x128xf32>
    %50 = arith.addf %36, %49 : vector<1x128xf32>
    %c6 = arith.constant 6 : index
    %51 = memref.load %arg1[%c6] : memref<42xf32, #tpu.memory_space<smem>>
    %52 = vector.broadcast %51 : f32 to vector<1x128xf32>
    %53 = arith.mulf %52, %0 : vector<1x128xf32>
    %c7 = arith.constant 7 : index
    %54 = memref.load %arg1[%c7] : memref<42xf32, #tpu.memory_space<smem>>
    %55 = vector.broadcast %54 : f32 to vector<1x128xf32>
    %56 = arith.mulf %55, %1 : vector<1x128xf32>
    %57 = arith.addf %53, %56 : vector<1x128xf32>
    %c23 = arith.constant 23 : index
    %58 = memref.load %arg1[%c23] : memref<42xf32, #tpu.memory_space<smem>>
    %59 = vector.broadcast %58 : f32 to vector<1x128xf32>
    %60 = arith.addf %57, %59 : vector<1x128xf32>
    %c33 = arith.constant 33 : index
    %61 = memref.load %arg1[%c33] : memref<42xf32, #tpu.memory_space<smem>>
    %62 = vector.broadcast %61 : f32 to vector<1x128xf32>
    %63 = arith.mulf %62, %60 : vector<1x128xf32>
    %64 = arith.addf %50, %63 : vector<1x128xf32>
    %c8 = arith.constant 8 : index
    %65 = memref.load %arg1[%c8] : memref<42xf32, #tpu.memory_space<smem>>
    %66 = vector.broadcast %65 : f32 to vector<1x128xf32>
    %67 = arith.mulf %66, %0 : vector<1x128xf32>
    %c9 = arith.constant 9 : index
    %68 = memref.load %arg1[%c9] : memref<42xf32, #tpu.memory_space<smem>>
    %69 = vector.broadcast %68 : f32 to vector<1x128xf32>
    %70 = arith.mulf %69, %1 : vector<1x128xf32>
    %71 = arith.addf %67, %70 : vector<1x128xf32>
    %c24 = arith.constant 24 : index
    %72 = memref.load %arg1[%c24] : memref<42xf32, #tpu.memory_space<smem>>
    %73 = vector.broadcast %72 : f32 to vector<1x128xf32>
    %74 = arith.addf %71, %73 : vector<1x128xf32>
    %c34 = arith.constant 34 : index
    %75 = memref.load %arg1[%c34] : memref<42xf32, #tpu.memory_space<smem>>
    %76 = vector.broadcast %75 : f32 to vector<1x128xf32>
    %77 = arith.mulf %76, %74 : vector<1x128xf32>
    %78 = arith.addf %64, %77 : vector<1x128xf32>
    %c10 = arith.constant 10 : index
    %79 = memref.load %arg1[%c10] : memref<42xf32, #tpu.memory_space<smem>>
    %80 = vector.broadcast %79 : f32 to vector<1x128xf32>
    %81 = arith.mulf %80, %0 : vector<1x128xf32>
    %c11 = arith.constant 11 : index
    %82 = memref.load %arg1[%c11] : memref<42xf32, #tpu.memory_space<smem>>
    %83 = vector.broadcast %82 : f32 to vector<1x128xf32>
    %84 = arith.mulf %83, %1 : vector<1x128xf32>
    %85 = arith.addf %81, %84 : vector<1x128xf32>
    %c25 = arith.constant 25 : index
    %86 = memref.load %arg1[%c25] : memref<42xf32, #tpu.memory_space<smem>>
    %87 = vector.broadcast %86 : f32 to vector<1x128xf32>
    %88 = arith.addf %85, %87 : vector<1x128xf32>
    %c35 = arith.constant 35 : index
    %89 = memref.load %arg1[%c35] : memref<42xf32, #tpu.memory_space<smem>>
    %90 = vector.broadcast %89 : f32 to vector<1x128xf32>
    %91 = arith.mulf %90, %88 : vector<1x128xf32>
    %92 = arith.addf %78, %91 : vector<1x128xf32>
    %c12 = arith.constant 12 : index
    %93 = memref.load %arg1[%c12] : memref<42xf32, #tpu.memory_space<smem>>
    %94 = vector.broadcast %93 : f32 to vector<1x128xf32>
    %95 = arith.mulf %94, %0 : vector<1x128xf32>
    %c13 = arith.constant 13 : index
    %96 = memref.load %arg1[%c13] : memref<42xf32, #tpu.memory_space<smem>>
    %97 = vector.broadcast %96 : f32 to vector<1x128xf32>
    %98 = arith.mulf %97, %1 : vector<1x128xf32>
    %99 = arith.addf %95, %98 : vector<1x128xf32>
    %c26 = arith.constant 26 : index
    %100 = memref.load %arg1[%c26] : memref<42xf32, #tpu.memory_space<smem>>
    %101 = vector.broadcast %100 : f32 to vector<1x128xf32>
    %102 = arith.addf %99, %101 : vector<1x128xf32>
    %c36 = arith.constant 36 : index
    %103 = memref.load %arg1[%c36] : memref<42xf32, #tpu.memory_space<smem>>
    %104 = vector.broadcast %103 : f32 to vector<1x128xf32>
    %105 = arith.mulf %104, %102 : vector<1x128xf32>
    %106 = arith.addf %92, %105 : vector<1x128xf32>
    %c14 = arith.constant 14 : index
    %107 = memref.load %arg1[%c14] : memref<42xf32, #tpu.memory_space<smem>>
    %108 = vector.broadcast %107 : f32 to vector<1x128xf32>
    %109 = arith.mulf %108, %0 : vector<1x128xf32>
    %c15 = arith.constant 15 : index
    %110 = memref.load %arg1[%c15] : memref<42xf32, #tpu.memory_space<smem>>
    %111 = vector.broadcast %110 : f32 to vector<1x128xf32>
    %112 = arith.mulf %111, %1 : vector<1x128xf32>
    %113 = arith.addf %109, %112 : vector<1x128xf32>
    %c27 = arith.constant 27 : index
    %114 = memref.load %arg1[%c27] : memref<42xf32, #tpu.memory_space<smem>>
    %115 = vector.broadcast %114 : f32 to vector<1x128xf32>
    %116 = arith.addf %113, %115 : vector<1x128xf32>
    %c37 = arith.constant 37 : index
    %117 = memref.load %arg1[%c37] : memref<42xf32, #tpu.memory_space<smem>>
    %118 = vector.broadcast %117 : f32 to vector<1x128xf32>
    %119 = arith.mulf %118, %116 : vector<1x128xf32>
    %120 = arith.addf %106, %119 : vector<1x128xf32>
    %c16 = arith.constant 16 : index
    %121 = memref.load %arg1[%c16] : memref<42xf32, #tpu.memory_space<smem>>
    %122 = vector.broadcast %121 : f32 to vector<1x128xf32>
    %123 = arith.mulf %122, %0 : vector<1x128xf32>
    %c17 = arith.constant 17 : index
    %124 = memref.load %arg1[%c17] : memref<42xf32, #tpu.memory_space<smem>>
    %125 = vector.broadcast %124 : f32 to vector<1x128xf32>
    %126 = arith.mulf %125, %1 : vector<1x128xf32>
    %127 = arith.addf %123, %126 : vector<1x128xf32>
    %c28 = arith.constant 28 : index
    %128 = memref.load %arg1[%c28] : memref<42xf32, #tpu.memory_space<smem>>
    %129 = vector.broadcast %128 : f32 to vector<1x128xf32>
    %130 = arith.addf %127, %129 : vector<1x128xf32>
    %c38 = arith.constant 38 : index
    %131 = memref.load %arg1[%c38] : memref<42xf32, #tpu.memory_space<smem>>
    %132 = vector.broadcast %131 : f32 to vector<1x128xf32>
    %133 = arith.mulf %132, %130 : vector<1x128xf32>
    %134 = arith.addf %120, %133 : vector<1x128xf32>
    %c18 = arith.constant 18 : index
    %135 = memref.load %arg1[%c18] : memref<42xf32, #tpu.memory_space<smem>>
    %136 = vector.broadcast %135 : f32 to vector<1x128xf32>
    %137 = arith.mulf %136, %0 : vector<1x128xf32>
    %c19 = arith.constant 19 : index
    %138 = memref.load %arg1[%c19] : memref<42xf32, #tpu.memory_space<smem>>
    %139 = vector.broadcast %138 : f32 to vector<1x128xf32>
    %140 = arith.mulf %139, %1 : vector<1x128xf32>
    %141 = arith.addf %137, %140 : vector<1x128xf32>
    %c29 = arith.constant 29 : index
    %142 = memref.load %arg1[%c29] : memref<42xf32, #tpu.memory_space<smem>>
    %143 = vector.broadcast %142 : f32 to vector<1x128xf32>
    %144 = arith.addf %141, %143 : vector<1x128xf32>
    %c39 = arith.constant 39 : index
    %145 = memref.load %arg1[%c39] : memref<42xf32, #tpu.memory_space<smem>>
    %146 = vector.broadcast %145 : f32 to vector<1x128xf32>
    %147 = arith.mulf %146, %144 : vector<1x128xf32>
    %148 = arith.addf %134, %147 : vector<1x128xf32>
    %149 = math.tanh %148 : vector<1x128xf32>
    %c0_6 = arith.constant 0 : index
    %c0_7 = arith.constant 0 : index
    %150 = vector.load %arg3[%c0_6, %c0_7] : memref<1x128xf32, #tpu.memory_space<vmem>>, vector<1x128xf32>
    tpu.vector_store %arg3[%c0_6, %c0_7], %149 {strides = array<i32>} : memref<1x128xf32, #tpu.memory_space<vmem>>, vector<1x128xf32>,
    return
  }
  func.func @transform_0(%arg0: i32) -> i32 {
    %c0_i32 = arith.constant 0 : i32
    %c0_i32_0 = arith.constant 0 : i32
    return %c0_i32 : i32
  }
  func.func @transform_1(%arg0: i32) -> (i32, i32) {
    %c0_i32 = arith.constant 0 : i32
    %c0_i32_0 = arith.constant 0 : i32
    return %c0_i32, %arg0 : i32, i32
  }
  func.func @transform_2(%arg0: i32) -> (i32, i32) {
    %c0_i32 = arith.constant 0 : i32
    %c0_i32_0 = arith.constant 0 : i32
    return %c0_i32, %arg0 : i32, i32
  }
}

</mosaic_0001>

<llo_original>
// kernel: tpu_custom_call.1
$region0: #{tpu_custom_call.1}
  #allocation0 [shape = 'u32[]', space=smem, size = 0x4, offset = 0x4, fixed_abs, tag = 'smem constant byte address 0x4 - core index']
  #allocation1 [shape = 'u32[144,128]{1,0:T(1,128)}', space=vmem, size = 0x12000, scoped, tag = 'internal scratch']
  %s0 = inlined_call_operand.hbm [shape: f32[42], index: 0, kind: input, shape index: {}]
  %s1 = inlined_call_operand.hbm [shape: f32[3,128], index: 1, kind: input, shape index: {}]
  %s2 = inlined_call_operand.hbm [shape: f32[1,128], index: 2, kind: output, shape index: {}]
  %s3 = sld [smem:[#allocation0]]
  $region26: #{tpu_custom_call.1} parent=0
    _
  %s5 = ssub.s32 1, %s3
  %s6 = scalar_select 0, %s5, %s3
  $region1: #{tpu_custom_call.1} parent=0
    #allocation2 [shape = 'u8[512]{0}', space=smem, size = 0x200, scoped, tag = 'input window, operand 0, single buffered']
    #allocation3 [shape = 's32[1]{0}', space=sflag, size = 0x4, scoped, tag = 'scoped memory for tpu_custom_call.1']
    #allocation4 [shape = 's32[1]{0}', space=sflag, size = 0x4, scoped, tag = 'scoped memory for tpu_custom_call.1']
    #allocation5 [shape = 's32[1]{0}', space=sflag, size = 0x4, scoped, tag = 'scoped memory for tpu_custom_call.1']
    #allocation6 [shape = 'u8[2048]{0}', space=vmem, size = 0x800, scoped, tag = 'input window, operand 1, single buffered']
    #allocation7 [shape = 'u8[512]{0}', space=vmem, size = 0x400, scoped, tag = 'output window, operand 0, single buffered']
    %7 = vsyncpa [#allocation5], 0
    %8 = vsyncpa [#allocation3], 0
    %9 = vsyncpa [#allocation4], 0
    // Predicated region
    $region2: #{tpu_custom_call.1} parent=1 // pred_check
      _
    $region3: #{tpu_custom_call.1} parent=1 // pred_check_branch
      %11 = sbr.rel (0) target = $region5
    $region4: #{tpu_custom_call.1} parent=1 // pred_region
      %s13 = ssub.s32 16, 16
      %14 = vsyncadd [#allocation5], %s13
      %17 = dma.hbm_to_smem %s0, 16, [#allocation2], [#allocation5]
    $region5: #{tpu_custom_call.1} parent=1 // pred_fallthru
      _
    // Predicated region
    $region6: #{tpu_custom_call.1} parent=1 // pred_check
      _
    $region7: #{tpu_custom_call.1} parent=1 // pred_check_branch
      %19 = sbr.rel (0) target = $region9
    $region8: #{tpu_custom_call.1} parent=1 // pred_region
      %s21 = ssub.s32 64, 64
      %22 = vsyncadd [#allocation3], %s21
      %s24 = sshll.u32 [#allocation6], 4
      %s25 = int_to_ptr.vmem [resolvable:$true] %s24
      %27 = dma.hbm_to_vmem [thread:$0]  %s1, 64, %s25, [#allocation3]
    $region9: #{tpu_custom_call.1} parent=1 // pred_fallthru
      _
    // Predicated region
    $region10: #{tpu_custom_call.1} parent=1 // pred_check
      _
    $region11: #{tpu_custom_call.1} parent=1 // pred_check_branch
      %29 = sbr.rel (0) target = $region13
    $region12: #{tpu_custom_call.1} parent=1 // pred_region
      %30 = dma.done [#allocation5], 16
    $region13: #{tpu_custom_call.1} parent=1 // pred_fallthru
      _
    // Predicated region
    $region14: #{tpu_custom_call.1} parent=1 // pred_check
      _
    $region15: #{tpu_custom_call.1} parent=1 // pred_check_branch
      %32 = sbr.rel (0) target = $region17
    $region16: #{tpu_custom_call.1} parent=1 // pred_region
      %33 = dma.done [#allocation3], 64
    $region17: #{tpu_custom_call.1} parent=1 // pred_fallthru
      _
    %34 = sfence
    %v35 = vld [vmem:[#allocation6] sm:$0x1]
    %v36 = vld [vmem:[#allocation6 + $0x1] sm:$0x1]
    %v37 = vld [vmem:[#allocation6 + $0x2] sm:$0x1]
    %s38 = sld [smem:[#allocation2 + $0x28]]
    %v39 = vstv %s38
    %v40 = vmul.f32 %v39, %v37
    %s41 = sld [smem:[#allocation2 + $0x29]]
    %v42 = vstv %s41
    %v43 = vadd.f32 %v40, %v42
    %s44 = sld [smem:[#allocation2]]
    %v45 = vstv %s44
    %v46 = vmul.f32 %v45, %v35
    %s47 = sld [smem:[#allocation2 + $0x1]]
    %v48 = vstv %s47
    %v49 = vmul.f32 %v48, %v36
    %v50 = vadd.f32 %v46, %v49
    %s51 = sld [smem:[#allocation2 + $0x14]]
    %v52 = vstv %s51
    %v53 = vadd.f32 %v50, %v52
    %s54 = sld [smem:[#allocation2 + $0x1e]]
    %v55 = vstv %s54
    %v56 = vmul.f32 %v55, %v53
    %v57 = vadd.f32 %v43, %v56
    %s58 = sld [smem:[#allocation2 + $0x2]]
    %v59 = vstv %s58
    %v60 = vmul.f32 %v59, %v35
    %s61 = sld [smem:[#allocation2 + $0x3]]
    %v62 = vstv %s61
    %v63 = vmul.f32 %v62, %v36
    %v64 = vadd.f32 %v60, %v63
    %s65 = sld [smem:[#allocation2 + $0x15]]
    %v66 = vstv %s65
    %v67 = vadd.f32 %v64, %v66
    %s68 = sld [smem:[#allocation2 + $0x1f]]
    %v69 = vstv %s68
    %v70 = vmul.f32 %v69, %v67
    %v71 = vadd.f32 %v57, %v70
    %s72 = sld [smem:[#allocation2 + $0x4]]
    %v73 = vstv %s72
    %v74 = vmul.f32 %v73, %v35
    %s75 = sld [smem:[#allocation2 + $0x5]]
    %v76 = vstv %s75
    %v77 = vmul.f32 %v76, %v36
    %v78 = vadd.f32 %v74, %v77
    %s79 = sld [smem:[#allocation2 + $0x16]]
    %v80 = vstv %s79
    %v81 = vadd.f32 %v78, %v80
    %s82 = sld [smem:[#allocation2 + $0x20]]
    %v83 = vstv %s82
    %v84 = vmul.f32 %v83, %v81
    %v85 = vadd.f32 %v71, %v84
    %s86 = sld [smem:[#allocation2 + $0x6]]
    %v87 = vstv %s86
    %v88 = vmul.f32 %v87, %v35
    %s89 = sld [smem:[#allocation2 + $0x7]]
    %v90 = vstv %s89
    %v91 = vmul.f32 %v90, %v36
    %v92 = vadd.f32 %v88, %v91
    %s93 = sld [smem:[#allocation2 + $0x17]]
    %v94 = vstv %s93
    %v95 = vadd.f32 %v92, %v94
    %s96 = sld [smem:[#allocation2 + $0x21]]
    %v97 = vstv %s96
    %v98 = vmul.f32 %v97, %v95
    %v99 = vadd.f32 %v85, %v98
    %s100 = sld [smem:[#allocation2 + $0x8]]
    %v101 = vstv %s100
    %v102 = vmul.f32 %v101, %v35
    %s103 = sld [smem:[#allocation2 + $0x9]]
    %v104 = vstv %s103
    %v105 = vmul.f32 %v104, %v36
    %v106 = vadd.f32 %v102, %v105
    %s107 = sld [smem:[#allocation2 + $0x18]]
    %v108 = vstv %s107
    %v109 = vadd.f32 %v106, %v108
    %s110 = sld [smem:[#allocation2 + $0x22]]
    %v111 = vstv %s110
    %v112 = vmul.f32 %v111, %v109
    %v113 = vadd.f32 %v99, %v112
    %s114 = sld [smem:[#allocation2 + $0xa]]
    %v115 = vstv %s114
    %v116 = vmul.f32 %v115, %v35
    %s117 = sld [smem:[#allocation2 + $0xb]]
    %v118 = vstv %s117
    %v119 = vmul.f32 %v118, %v36
    %v120 = vadd.f32 %v116, %v119
    %s121 = sld [smem:[#allocation2 + $0x19]]
    %v122 = vstv %s121
    %v123 = vadd.f32 %v120, %v122
    %s124 = sld [smem:[#allocation2 + $0x23]]
    %v125 = vstv %s124
    %v126 = vmul.f32 %v125, %v123
    %v127 = vadd.f32 %v113, %v126
    %s128 = sld [smem:[#allocation2 + $0xc]]
    %v129 = vstv %s128
    %v130 = vmul.f32 %v129, %v35
    %s131 = sld [smem:[#allocation2 + $0xd]]
    %v132 = vstv %s131
    %v133 = vmul.f32 %v132, %v36
    %v134 = vadd.f32 %v130, %v133
    %s135 = sld [smem:[#allocation2 + $0x1a]]
    %v136 = vstv %s135
    %v137 = vadd.f32 %v134, %v136
    %s138 = sld [smem:[#allocation2 + $0x24]]
    %v139 = vstv %s138
    %v140 = vmul.f32 %v139, %v137
    %v141 = vadd.f32 %v127, %v140
    %s142 = sld [smem:[#allocation2 + $0xe]]
    %v143 = vstv %s142
    %v144 = vmul.f32 %v143, %v35
    %s145 = sld [smem:[#allocation2 + $0xf]]
    %v146 = vstv %s145
    %v147 = vmul.f32 %v146, %v36
    %v148 = vadd.f32 %v144, %v147
    %s149 = sld [smem:[#allocation2 + $0x1b]]
    %v150 = vstv %s149
    %v151 = vadd.f32 %v148, %v150
    %s152 = sld [smem:[#allocation2 + $0x25]]
    %v153 = vstv %s152
    %v154 = vmul.f32 %v153, %v151
    %v155 = vadd.f32 %v141, %v154
    %s156 = sld [smem:[#allocation2 + $0x10]]
    %v157 = vstv %s156
    %v158 = vmul.f32 %v157, %v35
    %s159 = sld [smem:[#allocation2 + $0x11]]
    %v160 = vstv %s159
    %v161 = vmul.f32 %v160, %v36
    %v162 = vadd.f32 %v158, %v161
    %s163 = sld [smem:[#allocation2 + $0x1c]]
    %v164 = vstv %s163
    %v165 = vadd.f32 %v162, %v164
    %s166 = sld [smem:[#allocation2 + $0x26]]
    %v167 = vstv %s166
    %v168 = vmul.f32 %v167, %v165
    %v169 = vadd.f32 %v155, %v168
    %s170 = sld [smem:[#allocation2 + $0x12]]
    %v171 = vstv %s170
    %v172 = vmul.f32 %v171, %v35
    %s173 = sld [smem:[#allocation2 + $0x13]]
    %v174 = vstv %s173
    %v175 = vmul.f32 %v174, %v36
    %v176 = vadd.f32 %v172, %v175
    %s177 = sld [smem:[#allocation2 + $0x1d]]
    %v178 = vstv %s177
    %v179 = vadd.f32 %v176, %v178
    %s180 = sld [smem:[#allocation2 + $0x27]]
    %v181 = vstv %s180
    %v182 = vmul.f32 %v181, %v179
    %v183 = vadd.f32 %v169, %v182
    %v184 = vtanh.pop %v183
    %185 = vst [vmem:[#allocation7] sm:$0x1] %v184
    // Predicated region
    $region18: #{tpu_custom_call.1} parent=1 // pred_check
      _
    $region19: #{tpu_custom_call.1} parent=1 // pred_check_branch
      %187 = sbr.rel (0) target = $region21
    $region20: #{tpu_custom_call.1} parent=1 // pred_region
      %s189 = ssub.s32 16, 16
      %190 = vsyncadd [#allocation4], %s189
      %s192 = sshll.u32 [#allocation7], 4
      %s193 = int_to_ptr.vmem [resolvable:$true] %s192
      %195 = dma.vmem_to_hbm [thread:$0]  %s193, 16, %s2, [#allocation4]
    $region21: #{tpu_custom_call.1} parent=1 // pred_fallthru
      _
    // Predicated region
    $region22: #{tpu_custom_call.1} parent=1 // pred_check
      _
    $region23: #{tpu_custom_call.1} parent=1 // pred_check_branch
      %197 = sbr.rel (0) target = $region25
    $region24: #{tpu_custom_call.1} parent=1 // pred_region
      %198 = dma.done [#allocation4], 16
    $region25: #{tpu_custom_call.1} parent=1 // pred_fallthru
      _
    %199 = vsyncpa [#allocation3], 1
    %200 = vsyncpa [#allocation4], 1
    %201 = vsyncpa [#allocation5], 1

</llo_original>
